<compile_context>
chip_gen: v6e
topology: v6e:2x2x1
jax: 0.10.0
libtpu: 0.0.40
codegen_flags: <defaults>
</compile_context>

<pallas_src>
import functools

import jax
import jax.numpy as jnp
from jax.experimental import pallas as pl
from jax.experimental.pallas import tpu as pltpu

EPS = 1e-5
MXU_DTYPE = jnp.float32


def _floor_div(a, d):
    # Exact floor(a / d) for small non-negative integer-valued f32 `a` and a
    # static positive int `d` (avoids integer vector division in the kernel).
    # Exact while a fits f32 integers (~2^22) -- fine at 768 pixels; switch to
    # int iota / SMEM tables before scaling to huge N*H*W.
    return jnp.floor((a + 0.5) * (1.0 / d))


def basic_block_kernel(x_ref, w1_ref, g1_ref, b1_ref, w2_ref, g2_ref, b2_ref,
                       o_ref, *, H, W, n_valid, rows_valid, roll_sign):
    C, rows = o_ref.shape                 # (planes, lane-padded pixel count)
    Hp, Wp = H + 2, W + 2

    # ---- interior & valid pixel mask (1, rows), generated in-kernel --------
    p = jax.lax.broadcasted_iota(jnp.int32, (1, rows), 1).astype(jnp.float32)
    q = p - _floor_div(p, Hp * Wp) * (Hp * Wp)       # pixel index inside image
    hh = _floor_div(q, Wp)                           # padded row    0..Hp-1
    ww = q - hh * Wp                                 # padded column 0..Wp-1
    mask = ((p < float(rows_valid)) &                # exclude phantom lane pad
            (hh >= 1.0) & (hh <= float(H)) &
            (ww >= 1.0) & (ww <= float(W))).astype(jnp.float32)

    def conv3x3(src, w_ref):
        # 9 tap matmuls accumulated in f32. Each tap is a 768-lane roll (XLU)
        # of the full-width value; the circular wrap only reaches pixels that
        # the mask removes, so no lane guards are needed.
        acc = None
        for t in range(9):
            off = (t // 3 - 1) * Wp + (t % 3 - 1)
            tap = src if off == 0 else pltpu.roll(
                src, (roll_sign * off) % rows, axis=1)
            part = jnp.dot(w_ref[t].astype(MXU_DTYPE), tap.astype(MXU_DTYPE),
                           preferred_element_type=jnp.float32)
            acc = part if acc is None else acc + part
        return acc

    def batchnorm(acc, g_ref, b_ref):
        # training-mode BatchNorm2d: fused one-pass masked stats over the
        # N*H*W interior pixels, biased variance (E[x^2] - mu^2).
        m = acc * mask
        mu = jnp.sum(m, axis=1, keepdims=True) * (1.0 / n_valid)
        var = jnp.sum(m * m, axis=1, keepdims=True) * (1.0 / n_valid) - mu * mu
        return (acc - mu) * jax.lax.rsqrt(var + EPS) * g_ref[...] + b_ref[...]

    # conv1 -> bn1 -> relu; masking zeroes the padding ring and the phantom
    # lane-pad pixels, which gives conv2 its correct zero padding for free.
    h1 = jnp.maximum(batchnorm(conv3x3(x_ref[...], w1_ref), g1_ref, b1_ref),
                     0.0) * mask

    # conv2 -> bn2 (h1 stays in vregs; no staging scratch).
    h2 = batchnorm(conv3x3(h1, w2_ref), g2_ref, b2_ref)

    # identity shortcut (re-read x from VMEM at the point of use, so it is not
    # held live across both convs) + relu.  Padding-ring / phantom lanes are
    # left unmasked; the wrapper slices them away.
    o_ref[...] = jnp.maximum(h2 + x_ref[...], 0.0)


def _roll_probe_kernel(x_ref, o_ref):
    o_ref[...] = pltpu.roll(x_ref[...], 1, axis=1)


def _resolve_roll_sign():
    # pltpu.roll is expected to follow jnp.roll semantics (element i -> i+s);
    # probe it once at import so the check stays out of the forward's trace.
    x = jnp.arange(8 * 128, dtype=jnp.float32).reshape(8, 128)
    vmem = pl.BlockSpec(memory_space=pltpu.MemorySpace.VMEM)
    y = pl.pallas_call(_roll_probe_kernel,
                       out_shape=jax.ShapeDtypeStruct((8, 128), jnp.float32),
                       in_specs=[vmem], out_specs=vmem)(x)
    return -1 if bool(jnp.all(y == jnp.roll(x, 1, axis=1))) else 1


_ROLL_SIGN = _resolve_roll_sign()


def basic_block_forward(x_nchw, w1_oihw, g1, b1, w2_oihw, g2, b2):
    N, Cin, H, W = x_nchw.shape
    Cout = w1_oihw.shape[0]
    assert Cin == Cout, "identity-shortcut path requires in_planes == planes"
    # TODO(synk): option 'A' strided zero-pad shortcut (stride != 1 or
    # in_planes != planes) is not implemented here.
    Hp, Wp = H + 2, W + 2
    rows_valid = N * Hp * Wp
    rows = pl.cdiv(rows_valid, 128) * 128            # lane-dense pixel axis

    # glue: NCHW -> (C, pixels) with 1-pixel spatial zero pad, lane-padded to
    # a multiple of 128 (phantom pixels are zero and masked in-kernel).
    x_pad = jnp.pad(x_nchw.astype(jnp.float32),
                    ((0, 0), (0, 0), (1, 1), (1, 1)))
    x_t = jnp.transpose(x_pad, (1, 0, 2, 3)).reshape(Cin, rows_valid)
    x_big = jnp.pad(x_t, ((0, 0), (0, rows - rows_valid)))

    # glue: per-tap weight blocks (9, Cout, Cin), tap index t = dy*3 + dx.
    w1_pk = jnp.transpose(w1_oihw, (2, 3, 0, 1)).reshape(9, Cout, Cin)
    w2_pk = jnp.transpose(w2_oihw, (2, 3, 0, 1)).reshape(9, Cout, Cout)
    g1_, b1_ = g1.reshape(Cout, 1), b1.reshape(Cout, 1)
    g2_, b2_ = g2.reshape(Cout, 1), b2.reshape(Cout, 1)

    kernel = functools.partial(basic_block_kernel, H=H, W=W,
                               n_valid=float(N * H * W),
                               rows_valid=rows_valid, roll_sign=_ROLL_SIGN)
    vmem = pl.BlockSpec(memory_space=pltpu.MemorySpace.VMEM)
    bytes_accessed = 4 * (x_big.size + w1_pk.size + w2_pk.size
                          + 4 * Cout + Cout * rows)
    out_t = pl.pallas_call(
        kernel,
        out_shape=jax.ShapeDtypeStruct((Cout, rows), jnp.float32),
        in_specs=[vmem] * 7,
        out_specs=vmem,
        cost_estimate=pl.CostEstimate(
            flops=2 * (2 * 9 * Cin * Cout * N * H * W),   # two 3x3 convs
            transcendentals=2 * Cout,                     # two BN rsqrt
            bytes_accessed=bytes_accessed),
    )(x_big, w1_pk, g1_, b1_, w2_pk, g2_, b2_)

    out = out_t[:, :rows_valid].reshape(Cout, N, Hp, Wp)[:, :, 1:-1, 1:-1]
    return jnp.transpose(out, (1, 0, 2, 3))          # back to NCHW


def ref_forward(x, w1, g1, b1, w2, g2, b2):
    # pure-JAX reference of BasicBlock.forward (training-mode BN, identity
    # shortcut)
    def conv(a, w):
        return jax.lax.conv_general_dilated(
            a, w, window_strides=(1, 1), padding=((1, 1), (1, 1)),
            dimension_numbers=('NCHW', 'OIHW', 'NCHW'))

    def bn(a, g, b):
        mu = jnp.mean(a, axis=(0, 2, 3), keepdims=True)
        var = jnp.mean((a - mu) ** 2, axis=(0, 2, 3), keepdims=True)
        return ((a - mu) * jax.lax.rsqrt(var + EPS)
                * g.reshape(1, -1, 1, 1) + b.reshape(1, -1, 1, 1))

    out = jax.nn.relu(bn(conv(x, w1), g1, b1))
    out = bn(conv(out, w2), g2, b2)
    return jax.nn.relu(out + x)


if __name__ == "__main__":
    N, C, H, W = 2, 8, 16, 16
    key = jax.random.PRNGKey(0)
    kx, k1, k2, kg1, kb1, kg2, kb2 = jax.random.split(key, 7)

    x = jax.random.normal(kx, (N, C, H, W), jnp.float32)
    w1 = 0.2 * jax.random.normal(k1, (C, C, 3, 3), jnp.float32)   # conv1 OIHW
    w2 = 0.2 * jax.random.normal(k2, (C, C, 3, 3), jnp.float32)   # conv2 OIHW
    g1 = 1.0 + 0.1 * jax.random.normal(kg1, (C,), jnp.float32)    # bn1 gamma
    b1 = 0.1 * jax.random.normal(kb1, (C,), jnp.float32)          # bn1 beta
    g2 = 1.0 + 0.1 * jax.random.normal(kg2, (C,), jnp.float32)    # bn2 gamma
    b2 = 0.1 * jax.random.normal(kb2, (C,), jnp.float32)          # bn2 beta

    out = jax.block_until_ready(basic_block_forward(x, w1, g1, b1, w2, g2, b2))
    ref = jax.block_until_ready(ref_forward(x, w1, g1, b1, w2, g2, b2))
    assert out.shape == (N, C, H, W)
    assert jnp.allclose(out, ref, atol=2e-3, rtol=2e-3), "mismatch vs reference"
    print("KERNEL_OK")
</pallas_src>

<mosaic_0001>
module attributes {stable_mosaic.version = 11 : i64} {
  func.func @_roll_probe_kernel(%arg0: memref<8x128xf32, #tpu.memory_space<vmem>>, %arg1: memref<8x128xf32, #tpu.memory_space<vmem>>) attributes {dimension_semantics = [], scalar_prefetch = 0 : i64, scratch_operands = 0 : i64, tpu.core_type = #tpu.core_type<tc>} {
    %c0 = arith.constant 0 : index
    %c0_0 = arith.constant 0 : index
    %0 = vector.load %arg0[%c0, %c0_0] : memref<8x128xf32, #tpu.memory_space<vmem>>, vector<8x128xf32>
    %c1_i32 = arith.constant 1 : i32
    %1 = tpu.dynamic_rotate %0 by %c1_i32 dim 1 : vector<8x128xf32>, i32 -> vector<8x128xf32>
    %c0_1 = arith.constant 0 : index
    %c0_2 = arith.constant 0 : index
    %2 = vector.load %arg1[%c0_1, %c0_2] : memref<8x128xf32, #tpu.memory_space<vmem>>, vector<8x128xf32>
    tpu.vector_store %arg1[%c0_1, %c0_2], %1 {strides = array<i32>} : memref<8x128xf32, #tpu.memory_space<vmem>>, vector<8x128xf32>,
    return
  }
}

</mosaic_0001>

<llo_original>
// kernel: tpu_custom_call.1
$region0: #{tpu_custom_call.1}
  #allocation0 [shape = 'u32[]', space=smem, size = 0x4, offset = 0x4, fixed_abs, tag = 'smem constant byte address 0x4 - core index']
  #allocation1 [shape = 'u32[144,128]{1,0:T(1,128)}', space=vmem, size = 0x12000, scoped, tag = 'internal scratch']
  %s0 = inlined_call_operand.hbm [shape: f32[8,128], index: 0, kind: input, shape index: {}]
  %s1 = inlined_call_operand.hbm [shape: f32[8,128], index: 1, kind: output, shape index: {}]
  %s2 = sld [smem:[#allocation0]]
  $region18: #{tpu_custom_call.1} parent=0
    _
  %s4 = ssub.s32 1, %s2
  %s5 = scalar_select 0, %s4, %s2
  $region1: #{tpu_custom_call.1} parent=0
    #allocation2 [shape = 'u8[4096]{0}', space=vmem, size = 0x1000, scoped, tag = 'input window, operand 0, single buffered']
    #allocation3 [shape = 's32[1]{0}', space=sflag, size = 0x4, scoped, tag = 'scoped memory for tpu_custom_call.1']
    #allocation4 [shape = 's32[1]{0}', space=sflag, size = 0x4, scoped, tag = 'scoped memory for tpu_custom_call.1']
    #allocation5 [shape = 'u8[4096]{0}', space=vmem, size = 0x1000, scoped, tag = 'output window, operand 0, single buffered']
    %6 = vsyncpa [#allocation3], 0
    %7 = vsyncpa [#allocation4], 0
    // Predicated region
    $region2: #{tpu_custom_call.1} parent=1 // pred_check
      _
    $region3: #{tpu_custom_call.1} parent=1 // pred_check_branch
      %9 = sbr.rel (0) target = $region5
    $region4: #{tpu_custom_call.1} parent=1 // pred_region
      %s11 = ssub.s32 128, 128
      %12 = vsyncadd [#allocation3], %s11
      %s14 = sshll.u32 [#allocation2], 4
      %s15 = int_to_ptr.vmem [resolvable:$true] %s14
      %17 = dma.hbm_to_vmem [thread:$0]  %s0, 128, %s15, [#allocation3]
    $region5: #{tpu_custom_call.1} parent=1 // pred_fallthru
      _
    // Predicated region
    $region6: #{tpu_custom_call.1} parent=1 // pred_check
      _
    $region7: #{tpu_custom_call.1} parent=1 // pred_check_branch
      %19 = sbr.rel (0) target = $region9
    $region8: #{tpu_custom_call.1} parent=1 // pred_region
      %20 = dma.done [#allocation3], 128
    $region9: #{tpu_custom_call.1} parent=1 // pred_fallthru
      _
    %v21 = vld [vmem:[#allocation2] sm:$0xff]
    %22 = vrot.lane.b32.xlu0 %v21, 1
    %v23 = vpop.permute.xlu0 %22
    %24 = vst [vmem:[#allocation5] sm:$0xff] %v23
    // Predicated region
    $region10: #{tpu_custom_call.1} parent=1 // pred_check
      _
    $region11: #{tpu_custom_call.1} parent=1 // pred_check_branch
      %26 = sbr.rel (0) target = $region13
    $region12: #{tpu_custom_call.1} parent=1 // pred_region
      %s28 = ssub.s32 128, 128
      %29 = vsyncadd [#allocation4], %s28
      %s31 = sshll.u32 [#allocation5], 4
      %s32 = int_to_ptr.vmem [resolvable:$true] %s31
      %34 = dma.vmem_to_hbm [thread:$0]  %s32, 128, %s1, [#allocation4]
    $region13: #{tpu_custom_call.1} parent=1 // pred_fallthru
      _
    // Predicated region
    $region14: #{tpu_custom_call.1} parent=1 // pred_check
      _
    $region15: #{tpu_custom_call.1} parent=1 // pred_check_branch
      %36 = sbr.rel (0) target = $region17
    $region16: #{tpu_custom_call.1} parent=1 // pred_region
      %37 = dma.done [#allocation4], 128
    $region17: #{tpu_custom_call.1} parent=1 // pred_fallthru
      _
    %38 = vsyncpa [#allocation3], 1
    %39 = vsyncpa [#allocation4], 1

</llo_original>
